<compile_context>
chip_gen: v7x
topology: tpu7x:2x2x1
jax: 0.10.0
libtpu: 0.0.40
codegen_flags: <defaults>
</compile_context>

<pallas_src>
import functools

import jax
import jax.numpy as jnp
from jax.experimental import pallas as pl
from jax.experimental.pallas import tpu as pltpu


# ---------------------------------------------------------------------------
# Kernel
# ---------------------------------------------------------------------------
def _make_kernel(*, masked, mask_is_bool, inv_s, s_total, ts, acc_width, tail_mask):
    def kernel(*refs):
        if masked:
            inp_ref, xij_ref, mask_ref, out_ref, acc_ref = refs
        else:
            inp_ref, xij_ref, out_ref, acc_ref = refs
        k = pl.program_id(1)

        @pl.when(k == 0)
        def _():
            acc_ref[...] = jnp.zeros_like(acc_ref)

        # Native-dtype loads; casts are VPU ops hidden under the DMA bottleneck.
        diff = inp_ref[...].astype(jnp.float32) - jnp.log(
            xij_ref[...].astype(jnp.float32) + 1.0)
        sq = diff * diff

        if masked:
            m = mask_ref[...]
            if mask_is_bool:
                sq = jnp.where(m, sq, 0.0)            # single select, no cast+mul
            else:
                sq = sq * m.astype(jnp.float32)       # exact arbitrary-weight semantics

        if tail_mask:
            # Reduction axis tiled with ts that does not divide S: zero the
            # out-of-range tail columns so OOB garbage never pollutes real rows.
            col = jax.lax.broadcasted_iota(jnp.int32, sq.shape, 1) + k * ts
            sq = jnp.where(col < s_total, sq, 0.0)

        if acc_width == 128:
            # Lane-dense accumulation: fold 128-wide lane chunks with pure,
            # lane-aligned VPU adds.  The single cross-lane (XLU) reduce is
            # deferred to the last reduction step below.
            folded = sq[:, 0:128]
            for c in range(1, ts // 128):
                folded = folded + sq[:, c * 128:(c + 1) * 128]
            acc_ref[...] += folded
        else:
            # Small / odd full-row block (single reduction step): one-off reduce.
            acc_ref[...] += jnp.sum(sq, axis=1, keepdims=True)

        @pl.when(k == pl.num_programs(1) - 1)
        def _():
            row_sum = acc_ref[...]
            if acc_width == 128:
                row_sum = jnp.sum(row_sum, axis=1, keepdims=True)
            out_ref[...] = (row_sum * inv_s).astype(out_ref.dtype)

    return kernel


# ---------------------------------------------------------------------------
# Hardware queries (best-effort, safe fallbacks)
# ---------------------------------------------------------------------------
def _vmem_capacity_bytes():
    try:
        cap = getattr(pltpu.get_tpu_info(), "vmem_capacity_bytes", None)
        if cap:
            return int(cap)
    except Exception:
        pass
    return 64 * 1024 * 1024  # conservative: v7x per-TensorCore VMEM


def _num_tensorcores():
    try:
        info = pltpu.get_tpu_info()
        for attr in ("num_cores", "core_count", "tensorcore_count", "num_tensorcores"):
            v = getattr(info, attr, None)
            if v:
                return int(v)
    except Exception:
        pass
    try:
        kind = jax.devices()[0].device_kind.lower()
        if any(t in kind for t in ("v7", "v4", "v5p")):  # 2 TensorCores per chip
            return 2
    except Exception:
        pass
    return 1  # v5e / v6e: single TensorCore


# ---------------------------------------------------------------------------
# Tiling
# ---------------------------------------------------------------------------
def _round_up(x, m):
    return ((x + m - 1) // m) * m


def _choose_tiles(B, S, bytes_per_elem, row_align, max_seq_tile, num_cores,
                  input_budget):
    # Sequence (lane / reduction) tile.
    if S <= max_seq_tile:
        ts = S
    else:
        cap = max(128, (max_seq_tile // 128) * 128)
        ts = cap
        cand = cap
        # Prefer an exact 128-multiple divisor (avoids tail masking), but only
        # if it stays reasonably large; otherwise keep the cap and mask.
        while cand >= max(128, cap // 2):
            if S % cand == 0:
                ts = cand
                break
            cand -= 128

    # Row tile: largest that keeps 2x (double-buffered) input tiles in budget.
    bm = input_budget // (2 * ts * bytes_per_elem)
    bm = min(bm, 4096)
    bm = max(row_align, (bm // row_align) * row_align)
    bm = min(bm, _round_up(B, row_align))

    # Keep >= num_cores row tiles only when the chip actually has more than one
    # TensorCore (splitting a small batch on a single-TC chip just doubles
    # per-step overhead for zero parallelism).
    if num_cores > 1:
        while bm > row_align and -(-B // bm) < num_cores:
            new_bm = max(row_align, ((bm // 2) // row_align) * row_align)
            if new_bm == bm:
                break
            bm = new_bm
    return bm, ts


# ---------------------------------------------------------------------------
# Wrapper
# ---------------------------------------------------------------------------
def sigmoid_bce_loss(inputs, target, xij, mask=None, *, max_seq_tile=2048):
    """Pallas port of SigmoidBCELoss.forward.

    inputs, xij, (mask): (B, S).  `target` is unused (the PyTorch module
    ignores it).  Returns (B,) float32.
    """
    del target  # unused by the reference module
    B, S = inputs.shape

    # No wrapper-side casts or pads: each extra elementwise pass over (B, S) is
    # a full HBM read+write, which dominates this memory-bound op.  Only 64-bit
    # dtypes (unsupported by TPU Pallas) are narrowed here.
    if inputs.dtype == jnp.float64:
        inputs = inputs.astype(jnp.float32)
    if xij.dtype == jnp.float64:
        xij = xij.astype(jnp.float32)

    masked = mask is not None
    mask_is_bool = False
    if masked:
        if mask.dtype == jnp.float64:
            mask = mask.astype(jnp.float32)
        elif mask.dtype == jnp.int64:
            mask = mask.astype(jnp.int32)
        mask_is_bool = mask.dtype == jnp.bool_

    itemsizes = [jnp.dtype(inputs.dtype).itemsize, jnp.dtype(xij.dtype).itemsize]
    if masked:
        itemsizes.append(jnp.dtype(mask.dtype).itemsize)
    bytes_per_elem = sum(itemsizes)
    # Strictest sublane alignment among shipped dtypes: f32->8, bf16->16, bool/i8->32.
    row_align = max(8, 32 // min(itemsizes))

    vmem_cap = _vmem_capacity_bytes()
    num_cores = _num_tensorcores()
    # ~60% of physical VMEM for the double-buffered input tiles
    # (v5e/v6e: ~77 MiB of 128; v7x: ~38 MiB of 64); rest is out/acc/headroom.
    input_budget = int(vmem_cap * 0.60)

    bm, ts = _choose_tiles(B, S, bytes_per_elem, row_align, max_seq_tile,
                           num_cores, input_budget)
    tail_mask = (S % ts) != 0
    acc_width = 128 if ts % 128 == 0 else 1

    grid = (pl.cdiv(B, bm), pl.cdiv(S, ts))
    in_spec = pl.BlockSpec((bm, ts), lambda i, k: (i, k))
    out_spec = pl.BlockSpec((bm, 1), lambda i, k: (i, 0))

    vmem_limit = (2 * bm * ts * bytes_per_elem          # double-buffered inputs
                  + bm * acc_width * 4 + 2 * bm * 4     # accumulator + output bufs
                  + (4 << 20))                          # headroom
    vmem_limit = int(min(max(vmem_limit, 16 << 20), int(vmem_cap * 0.85)))

    # TODO(synk): on v7x, verify the "parallel" batch axis is really sharded
    # across both TensorCores; if not, switch that axis to pltpu.CORE_PARALLEL.
    compiler_params = pltpu.CompilerParams(
        dimension_semantics=("parallel", "arbitrary"),
        vmem_limit_bytes=vmem_limit,
    )
    grid_spec = pltpu.PrefetchScalarGridSpec(
        num_scalar_prefetch=0,
        grid=grid,
        in_specs=[in_spec] * (3 if masked else 2),
        out_specs=out_spec,
        scratch_shapes=[pltpu.VMEM((bm, acc_width), jnp.float32)],
    )

    kernel = _make_kernel(masked=masked, mask_is_bool=mask_is_bool,
                          inv_s=1.0 / S, s_total=S, ts=ts,
                          acc_width=acc_width, tail_mask=tail_mask)
    args = (inputs, xij, mask) if masked else (inputs, xij)

    out = pl.pallas_call(
        kernel,
        out_shape=jax.ShapeDtypeStruct((B, 1), jnp.float32),
        grid_spec=grid_spec,
        compiler_params=compiler_params,
    )(*args)
    return out[:, 0]


# ---------------------------------------------------------------------------
# Reference + tests
# ---------------------------------------------------------------------------
def _reference(inputs, target, xij, mask=None):
    del target
    out = (inputs.astype(jnp.float32) - jnp.log(xij.astype(jnp.float32) + 1.0)) ** 2
    if mask is not None:
        out = out * mask.astype(jnp.float32)
    return jnp.mean(out, axis=1)


if __name__ == "__main__":
    key = jax.random.PRNGKey(0)
    k1, k2, k3, k4 = jax.random.split(key, 4)

    B, S = 48, 256
    inputs = jax.random.normal(k1, (B, S), dtype=jnp.float32)
    target = jax.random.normal(k2, (B, S), dtype=jnp.float32)  # unused
    xij = jax.random.uniform(k3, (B, S), dtype=jnp.float32, minval=0.0, maxval=10.0)
    mask_bool = jax.random.uniform(k4, (B, S)) > 0.3

    # bool mask shipped natively (1 B/elem), S tiled -> exercises the accumulator.
    out_m = sigmoid_bce_loss(inputs, target, xij, mask_bool, max_seq_tile=128)
    jax.block_until_ready(out_m)
    ref_m = _reference(inputs, target, xij, mask_bool)
    assert out_m.shape == (B,)
    assert jnp.allclose(out_m, ref_m, atol=1e-4, rtol=1e-5)

    # float (weight) mask: exact multiply semantics.
    mask_f32 = mask_bool.astype(jnp.float32) * 0.5
    out_mf = sigmoid_bce_loss(inputs, target, xij, mask_f32)
    jax.block_until_ready(out_mf)
    assert jnp.allclose(out_mf, _reference(inputs, target, xij, mask_f32),
                        atol=1e-4, rtol=1e-5)

    # integer (weight) mask: native-width read in-kernel, exact multiply.
    mask_i32 = mask_bool.astype(jnp.int32) * 3
    out_mi = sigmoid_bce_loss(inputs, target, xij, mask_i32)
    jax.block_until_ready(out_mi)
    assert jnp.allclose(out_mi, _reference(inputs, target, xij, mask_i32),
                        atol=1e-4, rtol=1e-5)

    # unmasked path.
    out_p = sigmoid_bce_loss(inputs, target, xij, None)
    jax.block_until_ready(out_p)
    assert jnp.allclose(out_p, _reference(inputs, target, xij, None),
                        atol=1e-4, rtol=1e-5)

    # bf16 inputs: native-dtype HBM read with in-kernel cast (no wrapper astype).
    out_bf = sigmoid_bce_loss(inputs.astype(jnp.bfloat16), target, xij, None)
    jax.block_until_ready(out_bf)
    ref_bf = _reference(inputs.astype(jnp.bfloat16), target, xij, None)
    assert jnp.allclose(out_bf, ref_bf, atol=1e-4, rtol=1e-5)

    # ragged batch (over-covered boundary row tile, no jnp.pad) + tiled
    # non-128-multiple S (exercises the in-kernel tail-column mask).
    B2, S2 = 50, 200
    i2 = jax.random.normal(k1, (B2, S2), dtype=jnp.float32)
    x2 = jax.random.uniform(k3, (B2, S2), dtype=jnp.float32, minval=0.0, maxval=10.0)
    out2 = sigmoid_bce_loss(i2, None, x2, None, max_seq_tile=128)
    jax.block_until_ready(out2)
    ref2 = _reference(i2, None, x2, None)
    assert out2.shape == (B2,)
    assert jnp.allclose(out2, ref2, atol=1e-4, rtol=1e-5)

    # small odd full-row block (single reduction step, narrow accumulator).
    B3, S3 = 5, 96
    i3 = jax.random.normal(k2, (B3, S3), dtype=jnp.float32)
    x3 = jax.random.uniform(k4, (B3, S3), dtype=jnp.float32, minval=0.0, maxval=10.0)
    out3 = sigmoid_bce_loss(i3, None, x3, None)
    jax.block_until_ready(out3)
    assert jnp.allclose(out3, _reference(i3, None, x3, None), atol=1e-4, rtol=1e-5)

    print("KERNEL_OK")
</pallas_src>

<mosaic_0001>
module attributes {stable_mosaic.version = 11 : i64} {
  func.func @kernel(%arg0: i32, %arg1: i32, %arg2: memref<64x128xf32, #tpu.memory_space<vmem>>, %arg3: memref<64x128xf32, #tpu.memory_space<vmem>>, %arg4: memref<64x128xi32, #tpu.memory_space<vmem>>, %arg5: memref<64x1xf32, #tpu.memory_space<vmem>>, %arg6: memref<64x128xf32, #tpu.memory_space<vmem>>) attributes {dimension_semantics = [#tpu.dimension_semantics<parallel>, #tpu.dimension_semantics<arbitrary>], iteration_bounds = array<i64: 1, 2>, scalar_prefetch = 0 : i64, scratch_operands = 1 : i64, tpu.core_type = #tpu.core_type<tc>, window_params = [{transform_indices = @transform_0, window_bounds = array<i64: 64, 128>}, {transform_indices = @transform_1, window_bounds = array<i64: 64, 128>}, {transform_indices = @transform_2, window_bounds = array<i64: 64, 128>}, {transform_indices = @transform_3, window_bounds = array<i64: 64, 1>}]} {
    %c0_i32 = arith.constant 0 : i32
    %0 = arith.cmpi eq, %arg1, %c0_i32 : i32
    %1 = arith.extui %0 : i1 to i32
    %c0_i32_0 = arith.constant 0 : i32
    %2 = arith.cmpi ne, %1, %c0_i32_0 : i32
    scf.if %2 {
      %cst_13 = arith.constant 0.000000e+00 : f32
      %20 = vector.broadcast %cst_13 : f32 to vector<64x128xf32>
      %c0_14 = arith.constant 0 : index
      %c0_15 = arith.constant 0 : index
      %21 = vector.load %arg6[%c0_14, %c0_15] : memref<64x128xf32, #tpu.memory_space<vmem>>, vector<64x128xf32>
      tpu.vector_store %arg6[%c0_14, %c0_15], %20 {strides = array<i32>} : memref<64x128xf32, #tpu.memory_space<vmem>>, vector<64x128xf32>,
    } else {
    }
    %c0 = arith.constant 0 : index
    %c0_1 = arith.constant 0 : index
    %3 = vector.load %arg2[%c0, %c0_1] : memref<64x128xf32, #tpu.memory_space<vmem>>, vector<64x128xf32>
    %c0_2 = arith.constant 0 : index
    %c0_3 = arith.constant 0 : index
    %4 = vector.load %arg3[%c0_2, %c0_3] : memref<64x128xf32, #tpu.memory_space<vmem>>, vector<64x128xf32>
    %cst = arith.constant 1.000000e+00 : f32
    %5 = vector.broadcast %cst : f32 to vector<64x128xf32>
    %6 = arith.addf %4, %5 : vector<64x128xf32>
    %7 = math.log %6 : vector<64x128xf32>
    %8 = arith.subf %3, %7 : vector<64x128xf32>
    %9 = arith.mulf %8, %8 : vector<64x128xf32>
    %c0_4 = arith.constant 0 : index
    %c0_5 = arith.constant 0 : index
    %10 = vector.load %arg4[%c0_4, %c0_5] : memref<64x128xi32, #tpu.memory_space<vmem>>, vector<64x128xi32>
    %cst_6 = arith.constant dense<0> : vector<64x128xi32>
    %11 = arith.cmpi ne, %10, %cst_6 : vector<64x128xi32>
    %cst_7 = arith.constant 0.000000e+00 : f32
    %12 = vector.broadcast %cst_7 : f32 to vector<64x128xf32>
    %13 = arith.select %11, %9, %12 : vector<64x128xi1>, vector<64x128xf32>
    %c0_8 = arith.constant 0 : index
    %c0_9 = arith.constant 0 : index
    %14 = vector.load %arg6[%c0_8, %c0_9] : memref<64x128xf32, #tpu.memory_space<vmem>>, vector<64x128xf32>
    %15 = arith.addf %14, %13 : vector<64x128xf32>
    %c0_10 = arith.constant 0 : index
    %c0_11 = arith.constant 0 : index
    %16 = vector.load %arg6[%c0_10, %c0_11] : memref<64x128xf32, #tpu.memory_space<vmem>>, vector<64x128xf32>
    tpu.vector_store %arg6[%c0_10, %c0_11], %15 {strides = array<i32>} : memref<64x128xf32, #tpu.memory_space<vmem>>, vector<64x128xf32>,
    %c1_i32 = arith.constant 1 : i32
    %17 = arith.cmpi eq, %arg1, %c1_i32 : i32
    %18 = arith.extui %17 : i1 to i32
    %c0_i32_12 = arith.constant 0 : i32
    %19 = arith.cmpi ne, %18, %c0_i32_12 : i32
    scf.if %19 {
      %c0_13 = arith.constant 0 : index
      %c0_14 = arith.constant 0 : index
      %20 = vector.load %arg6[%c0_13, %c0_14] : memref<64x128xf32, #tpu.memory_space<vmem>>, vector<64x128xf32>
      %cst_15 = arith.constant dense<0.000000e+00> : vector<64xf32>
      %21 = vector.multi_reduction <add>, %20, %cst_15 [1] : vector<64x128xf32> to vector<64xf32>
      %22 = vector.shape_cast %21 : vector<64xf32> to vector<64x1xf32>
      %cst_16 = arith.constant 3.906250e-03 : f32
      %23 = vector.broadcast %cst_16 : f32 to vector<64x1xf32>
      %24 = arith.mulf %22, %23 : vector<64x1xf32>
      %c0_17 = arith.constant 0 : index
      %c0_18 = arith.constant 0 : index
      %25 = vector.load %arg5[%c0_17, %c0_18] : memref<64x1xf32, #tpu.memory_space<vmem>>, vector<64x1xf32>
      tpu.vector_store %arg5[%c0_17, %c0_18], %24 {strides = array<i32>} : memref<64x1xf32, #tpu.memory_space<vmem>>, vector<64x1xf32>,
    } else {
    }
    return
  }
  func.func @transform_0(%arg0: i32, %arg1: i32) -> (i32, i32) {
    %c0_i32 = arith.constant 0 : i32
    return %arg0, %arg1 : i32, i32
  }
  func.func @transform_1(%arg0: i32, %arg1: i32) -> (i32, i32) {
    %c0_i32 = arith.constant 0 : i32
    return %arg0, %arg1 : i32, i32
  }
  func.func @transform_2(%arg0: i32, %arg1: i32) -> (i32, i32) {
    %c0_i32 = arith.constant 0 : i32
    return %arg0, %arg1 : i32, i32
  }
  func.func @transform_3(%arg0: i32, %arg1: i32) -> (i32, i32) {
    %c0_i32 = arith.constant 0 : i32
    %c0_i32_0 = arith.constant 0 : i32
    return %arg0, %c0_i32 : i32, i32
  }
}

</mosaic_0001>

<llo_original>
// kernel: tpu_custom_call.1
$region0: #{tpu_custom_call.1}
  #allocation0 [shape = 'u32[]', space=smem, size = 0x4, offset = 0x4, fixed_abs, tag = 'smem constant byte address 0x4 - core index']
  #allocation1 [shape = 'u32[144,128]{1,0:T(1,128)}', space=vmem, size = 0x12000, scoped, tag = 'internal scratch']
  #allocation2 [shape = 'f32[64,128]{1,0:T(8,128)}', space=vmem, size = 0x8000, scoped, tag = 'scratch operand']
  %s0 = inlined_call_operand.vmem [shape: f32[48,256], index: 0, kind: input, shape index: {}]
  %s1 = inlined_call_operand.hbm [shape: f32[48,256], index: 1, kind: input, shape index: {}]
  %s2 = inlined_call_operand.vmem [shape: s32[48,256], index: 2, kind: input, shape index: {}]
  %s3 = inlined_call_operand.vmem [shape: f32[48,1], index: 3, kind: output, shape index: {}]
  %s4 = sld [smem:[#allocation0]]
  $region209: #{tpu_custom_call.1} parent=0
    _
  %s6 = ssub.s32 1, %s4
  %s7 = scalar_select 0, %s6, %s4
  $region1: #{tpu_custom_call.1} parent=0
    #allocation3 [shape = 'u8[65536]{0}', space=vmem, size = 0x10000, scoped, tag = 'input window, operand 0']
    #allocation4 [shape = 'u8[65536]{0}', space=vmem, size = 0x10000, scoped, tag = 'input window, operand 1']
    #allocation5 [shape = 's32[2]{0}', space=sflag, size = 0x8, scoped, tag = 'scoped memory for tpu_custom_call.1']
    #allocation6 [shape = 'u8[65536]{0}', space=vmem, size = 0x10000, scoped, tag = 'input window, operand 2']
    #allocation7 [shape = 'u8[32768]{0}', space=vmem, size = 0x8000, scoped, tag = 'output window, operand 0, single buffered']
    %8 = vsyncpa [#allocation5], 0
    %s9 = scalar_lea.sflag [#allocation5], 1
    %10 = vsyncpa %s9, 0
    loop: start=0, step=1, limit=4
    $region2: #{tpu_custom_call.1} parent=1 // loop_pre_header
      _
    $region3: #{tpu_custom_call.1} parent=1 // loop_header
      %s12 = sphi 0, %s16
      %p13 = scmp.ge.s32.totalorder %s12, 4
      %s19 = sphi 0, %s31
      %s20 = sphi 0, %s27
      %s21 = sphi 0, %s19
      %s22 = sphi 0, %s20
      %s23 = sphi 0, %s21
      %s24 = sphi 0, %s22
      %s36 = sphi 0, %s38
      %s39 = sphi 0, %s36
      %s40 = sphi 0, %s39
      %s56 = sphi 0, %s40
      %s64 = sphi 0, %s66
      %s67 = sphi 0, %s64
      %s68 = sphi 0, %s67
      %s84 = sphi 0, %s68
      %s92 = sphi 0, %s94
      %s95 = sphi 0, %s92
      %s96 = sphi 0, %s95
      %s112 = sphi 0, %s96
      %s118 = sphi 0, %s120
      %s121 = sphi 0, %s118
      %s122 = sphi 0, %s121
      %s138 = sphi 0, %s122
    $region4: #{tpu_custom_call.1} parent=1 // loop_header_branch
      %15 = sbr.rel (%p13) target = $region8
    $region5: #{tpu_custom_call.1} parent=1 // loop_body
      %s17 = ssub.s32 %s12, 1
      %s18 = ssub.s32 %s12, 2
      %s25 = sadd.s32 1, %s20
      %p26 = scmp.ge.s32.totalorder %s25, 2
      %s27 = scalar_select %p26, 0, %s25
      %s28 = sadd.s32 1, %s19
      %s29 = scalar_select %p26, %s28, %s19
      %p30 = scmp.ge.s32.totalorder %s29, 1
      %s31 = scalar_select %p30, 0, %s29
      %s32 = ssub.s32 %s19, %s31
      %s33 = ssub.s32 %s20, %s27
      %s34 = sor.u32 %s32, %s33
      %p35 = scmp.eq.s32.totalorder %s34, 0
      %s37 = sadd.s32 %s36, 1
      %s38 = scalar_select %p35, %s36, %s37
      %p41 = pneg %p35
      %p42 = scmp.eq.s32.totalorder %s12, 1
      %p43 = por %p41, %p42
      %p44 = scmp.ne.s32.totalorder %s36, %s39
      %p45 = scmp.eq.s32.totalorder %s12, 0
      %p46 = por %p44, %p45
      %p47 = scmp.ne.s32.totalorder %s36, %s39
      %p48 = scmp.eq.s32.totalorder %s17, 1
      %p49 = por %p47, %p48
      %p50 = scmp.ne.s32.totalorder %s39, %s40
      %p51 = scmp.eq.s32.totalorder %s17, 0
      %p52 = por %p50, %p51
      %p53 = scmp.ne.s32.totalorder %s39, %s40
      %p54 = scmp.eq.s32.totalorder %s18, 1
      %p55 = por %p53, %p54
      %p57 = scmp.ne.s32.totalorder %s40, %s56
      %p58 = scmp.eq.s32.totalorder %s18, 0
      %p59 = por %p57, %p58
      %s60 = ssub.s32 %s19, %s31
      %s61 = ssub.s32 %s20, %s27
      %s62 = sor.u32 %s60, %s61
      %p63 = scmp.eq.s32.totalorder %s62, 0
      %s65 = sadd.s32 %s64, 1
      %s66 = scalar_select %p63, %s64, %s65
      %p69 = pneg %p63
      %p70 = scmp.eq.s32.totalorder %s12, 1
      %p71 = por %p69, %p70
      %p72 = scmp.ne.s32.totalorder %s64, %s67
      %p73 = scmp.eq.s32.totalorder %s12, 0
      %p74 = por %p72, %p73
      %p75 = scmp.ne.s32.totalorder %s64, %s67
      %p76 = scmp.eq.s32.totalorder %s17, 1
      %p77 = por %p75, %p76
      %p78 = scmp.ne.s32.totalorder %s67, %s68
      %p79 = scmp.eq.s32.totalorder %s17, 0
      %p80 = por %p78, %p79
      %p81 = scmp.ne.s32.totalorder %s67, %s68
      %p82 = scmp.eq.s32.totalorder %s18, 1
      %p83 = por %p81, %p82
      %p85 = scmp.ne.s32.totalorder %s68, %s84
      %p86 = scmp.eq.s32.totalorder %s18, 0
      %p87 = por %p85, %p86
      %s88 = ssub.s32 %s19, %s31
      %s89 = ssub.s32 %s20, %s27
      %s90 = sor.u32 %s88, %s89
      %p91 = scmp.eq.s32.totalorder %s90, 0
      %s93 = sadd.s32 %s92, 1
      %s94 = scalar_select %p91, %s92, %s93
      %p97 = pneg %p91
      %p98 = scmp.eq.s32.totalorder %s12, 1
      %p99 = por %p97, %p98
      %p100 = scmp.ne.s32.totalorder %s92, %s95
      %p101 = scmp.eq.s32.totalorder %s12, 0
      %p102 = por %p100, %p101
      %p103 = scmp.ne.s32.totalorder %s92, %s95
      %p104 = scmp.eq.s32.totalorder %s17, 1
      %p105 = por %p103, %p104
      %p106 = scmp.ne.s32.totalorder %s95, %s96
      %p107 = scmp.eq.s32.totalorder %s17, 0
      %p108 = por %p106, %p107
      %p109 = scmp.ne.s32.totalorder %s95, %s96
      %p110 = scmp.eq.s32.totalorder %s18, 1
      %p111 = por %p109, %p110
      %p113 = scmp.ne.s32.totalorder %s96, %s112
      %p114 = scmp.eq.s32.totalorder %s18, 0
      %p115 = por %p113, %p114
      %s116 = ssub.s32 %s19, %s31
      %p117 = scmp.eq.s32.totalorder %s116, 0
      %s119 = sadd.s32 %s118, 1
      %s120 = scalar_select %p117, %s118, %s119
      %p123 = pneg %p117
      %p124 = scmp.eq.s32.totalorder %s12, 1
      %p125 = por %p123, %p124
      %p126 = scmp.ne.s32.totalorder %s118, %s121
      %p127 = scmp.eq.s32.totalorder %s12, 0
      %p128 = por %p126, %p127
      %p129 = scmp.ne.s32.totalorder %s118, %s121
      %p130 = scmp.eq.s32.totalorder %s17, 1
      %p131 = por %p129, %p130
      %p132 = scmp.ne.s32.totalorder %s121, %s122
      %p133 = scmp.eq.s32.totalorder %s17, 0
      %p134 = por %p132, %p133
      %p135 = scmp.ne.s32.totalorder %s121, %s122
      %p136 = scmp.eq.s32.totalorder %s18, 1
      %p137 = por %p135, %p136
      %p139 = scmp.ne.s32.totalorder %s122, %s138
      %p140 = scmp.eq.s32.totalorder %s18, 0
      %p141 = por %p139, %p140
      %p142 = scmp.le.s32.totalorder 1, %s12
      %p143 = scmp.lt.s32.totalorder %s12, 3
      %p144 = pnand %p142, %p143
      %p145 = pneg %p144
      // Predicated region
      $region9: #{tpu_custom_call.1} parent=5 // pred_check
        _
      $region10: #{tpu_custom_call.1} parent=5 // pred_check_branch
        %147 = sbr.rel (%p144) target = $region12
      $region11: #{tpu_custom_call.1} parent=5 // pred_region
        %s148 = ssub.s32 %s12, 1
      $region12: #{tpu_custom_call.1} parent=5 // pred_fallthru
        _
      %p149 = scmp.lt.s32.totalorder %s12, 2
      // Predicated region
      $region13: #{tpu_custom_call.1} parent=5 // pred_check
        %p150 = pneg %p149
      $region14: #{tpu_custom_call.1} parent=5 // pred_check_branch
        %152 = sbr.rel (%p150) target = $region16
      $region15: #{tpu_custom_call.1} parent=5 // pred_region
        // Predicated region
        $region17: #{tpu_custom_call.1} parent=15 // pred_check
          %p153 = pneg %p46
        $region18: #{tpu_custom_call.1} parent=15 // pred_check_branch
          %155 = sbr.rel (%p153) target = $region20
        $region19: #{tpu_custom_call.1} parent=15 // pred_region
          %s156 = sand.u32 %s36, 1
          %s157 = sand.u32 %s36, 1
          %s158 = smul.addr %s157, 64
          %s159 = scalar_lea.vmem [#allocation3], %s158
          %s160 = smul.u32 8, %s19
          %s161 = ssub.s32 6, %s160
          %s162 = smul.u32 128, %s161
          %p163 = scmp.ne.s32.totalorder 0, %s162
          %s164 = smul.addr %s160, 2
          %s165 = sadd.s32 %s20, %s164
          %s166 = smul.addr %s165, 8
          %s167 = scalar_lea.vmem %s0, %s166
          // Predicated region
          $region21: #{tpu_custom_call.1} parent=19 // pred_check
            %p168 = pneg %p163
          $region22: #{tpu_custom_call.1} parent=19 // pred_check_branch
            %170 = sbr.rel (%p168) target = $region24
          $region23: #{tpu_custom_call.1} parent=19 // pred_region
            // Predicated region
            $region25: #{tpu_custom_call.1} parent=23 // pred_check
              _
            $region26: #{tpu_custom_call.1} parent=23 // pred_check_branch
              %172 = sbr.rel (0) target = $region28
            $region27: #{tpu_custom_call.1} parent=23 // pred_region
              // Predicated region
              $region47: #{tpu_custom_call.1} parent=27 // pred_check
                _
              $region48: #{tpu_custom_call.1} parent=27 // pred_check_branch
                %232 = sbr.rel (0) target = $region50
              $region49: #{tpu_custom_call.1} parent=27 // pred_region
                %s233 = sdiv.u32.pop %s161, 6
                %s234 = srem.u32.pop %s161, 6
                // While loop
                $region51: #{tpu_custom_call.1} parent=49 // loop_pre_header
                  _
                $region52: #{tpu_custom_call.1} parent=49 // loop_header
                  %s236 = sphi 0, %s238
                  %p237 = scmp.ge.s32.totalorder %s236, %s233
                  %s241 = sphi 0, %s258
                  %s242 = sphi %s167, %s261
                  %s243 = sphi %s159, %s262
                $region53: #{tpu_custom_call.1} parent=49 // loop_header_branch
                  %240 = sbr.rel (%p237) target = $region57
                $region54: #{tpu_custom_call.1} parent=49 // loop_body
                  %v244 = vld [vmem:[%s242] sm:$0xff]
                  %245 = vst [vmem:[%s243] sm:$0xff] %v244
                  %v246 = vld [vmem:[%s242 + $0x10] sm:$0xff]
                  %247 = vst [vmem:[%s243 + $0x8] sm:$0xff] %v246
                  %v248 = vld [vmem:[%s242 + $0x20] sm:$0xff]
                  %249 = vst [vmem:[%s243 + $0x10] sm:$0xff] %v248
                  %v250 = vld [vmem:[%s242 + $0x30] sm:$0xff]
                  %251 = vst [vmem:[%s243 + $0x18] sm:$0xff] %v250
                  %v252 = vld [vmem:[%s242 + $0x40] sm:$0xff]
                  %253 = vst [vmem:[%s243 + $0x20] sm:$0xff] %v252
                  %v254 = vld [vmem:[%s242 + $0x50] sm:$0xff]
                  %255 = vst [vmem:[%s243 + $0x28] sm:$0xff] %v254
                  %s256 = sadd.s32 1, %s241
                  %p257 = scmp.ge.s32.totalorder %s256, %s233
                  %s258 = scalar_select %p257, 0, %s256
                  %s259 = smul.u32 %s258, 96
                  %s260 = smul.u32 %s258, 48
                  %s261 = scalar_lea.vmem %s167, %s259
                  %s262 = scalar_lea.vmem %s159, %s260 [#allocation3]
                $region55: #{tpu_custom_call.1} parent=49 // loop_footer
                  %s238 = sadd.s32 %s236, 1
                $region56: #{tpu_custom_call.1} parent=49 // loop_footer_branch
                  %235 = sbr.rel target = $region52
                $region57: #{tpu_custom_call.1} parent=49 // loop_exit
                  _
                %s263 = sdiv.u32.pop %s161, 6
                %s264 = srem.u32.pop %s161, 6
                %s265 = smul.u32 %s263, 6
                %s266 = smul.u32 16, %s265
                %s267 = scalar_lea.vmem %s167, %s266
                %s268 = smul.u32 8, %s265
                %s269 = scalar_lea.vmem %s159, %s268 [#allocation3]
                // While loop
                $region58: #{tpu_custom_call.1} parent=49 // loop_pre_header
                  _
                $region59: #{tpu_custom_call.1} parent=49 // loop_header
                  %s271 = sphi 0, %s273
                  %p272 = scmp.ge.s32.totalorder %s271, %s264
                  %s276 = sphi 0, %s283
                  %s277 = sphi %s267, %s286
                  %s278 = sphi %s269, %s287
                $region60: #{tpu_custom_call.1} parent=49 // loop_header_branch
                  %275 = sbr.rel (%p272) target = $region64
                $region61: #{tpu_custom_call.1} parent=49 // loop_body
                  %v279 = vld [vmem:[%s277] sm:$0xff]
                  %280 = vst [vmem:[%s278] sm:$0xff] %v279
                  %s281 = sadd.s32 1, %s276
                  %p282 = scmp.ge.s32.totalorder %s281, %s264
                  %s283 = scalar_select %p282, 0, %s281
                  %s284 = smul.u32 %s283, 16
                  %s285 = smul.u32 %s283, 8
                  %s286 = scalar_lea.vmem %s267, %s284
                  %s287 = scalar_lea.vmem %s269, %s285 [#allocation3]
                $region62: #{tpu_custom_call.1} parent=49 // loop_footer
                  %s273 = sadd.s32 %s271, 1
                $region63: #{tpu_custom_call.1} parent=49 // loop_footer_branch
                  %270 = sbr.rel target = $region59
                $region64: #{tpu_custom_call.1} parent=49 // loop_exit
                  _
              $region50: #{tpu_custom_call.1} parent=27 // pred_fallthru
                _
              // Predicated region
              $region65: #{tpu_custom_call.1} parent=27 // pred_check
                _
              $region66: #{tpu_custom_call.1} parent=27 // pred_check_branch
                %289 = sbr.rel target = $region68
              $region67: #{tpu_custom_call.1} parent=27 // pred_region
                _
              $region68: #{tpu_custom_call.1} parent=27 // pred_fallthru
                _
            $region28: #{tpu_custom_call.1} parent=23 // pred_fallthru
              _
            // Predicated region
            $region29: #{tpu_custom_call.1} parent=23 // pred_check
              _
            $region30: #{tpu_custom_call.1} parent=23 // pred_check_branch
              %174 = sbr.rel target = $region32
            $region31: #{tpu_custom_call.1} parent=23 // pred_region
              %s176 = sdiv.u32.pop %s161, 6
              %s177 = srem.u32.pop %s161, 6
              // While loop
              $region33: #{tpu_custom_call.1} parent=31 // loop_pre_header
                _
              $region34: #{tpu_custom_call.1} parent=31 // loop_header
                %s179 = sphi 0, %s181
                %p180 = scmp.ge.s32.totalorder %s179, %s176
                %s184 = sphi 0, %s201
                %s185 = sphi %s167, %s204
                %s186 = sphi %s159, %s205
              $region35: #{tpu_custom_call.1} parent=31 // loop_header_branch
                %183 = sbr.rel (%p180) target = $region39
              $region36: #{tpu_custom_call.1} parent=31 // loop_body
                %v187 = vld [vmem:[%s185] sm:$0xff]
                %188 = vst [vmem:[%s186] sm:$0xff] %v187
                %v189 = vld [vmem:[%s185 + $0x10] sm:$0xff]
                %190 = vst [vmem:[%s186 + $0x8] sm:$0xff] %v189
                %v191 = vld [vmem:[%s185 + $0x20] sm:$0xff]
                %192 = vst [vmem:[%s186 + $0x10] sm:$0xff] %v191
                %v193 = vld [vmem:[%s185 + $0x30] sm:$0xff]
                %194 = vst [vmem:[%s186 + $0x18] sm:$0xff] %v193
                %v195 = vld [vmem:[%s185 + $0x40] sm:$0xff]
                %196 = vst [vmem:[%s186 + $0x20] sm:$0xff] %v195
                %v197 = vld [vmem:[%s185 + $0x50] sm:$0xff]
                %198 = vst [vmem:[%s186 + $0x28] sm:$0xff] %v197
                %s199 = sadd.s32 1, %s184
                %p200 = scmp.ge.s32.totalorder %s199, %s176
                %s201 = scalar_select %p200, 0, %s199
                %s202 = smul.u32 %s201, 96
                %s203 = smul.u32 %s201, 48
                %s204 = scalar_lea.vmem %s167, %s202
                %s205 = scalar_lea.vmem %s159, %s203 [#allocation3]
              $region37: #{tpu_custom_call.1} parent=31 // loop_footer
                %s181 = sadd.s32 %s179, 1
              $region38: #{tpu_custom_call.1} parent=31 // loop_footer_branch
                %178 = sbr.rel target = $region34
              $region39: #{tpu_custom_call.1} parent=31 // loop_exit
                _
              %s206 = sdiv.u32.pop %s161, 6
              %s207 = srem.u32.pop %s161, 6
              %s208 = smul.u32 %s206, 6
              %s209 = smul.u32 16, %s208
              %s210 = scalar_lea.vmem %s167, %s209
              %s211 = smul.u32 8, %s208
              %s212 = scalar_lea.vmem %s159, %s211 [#allocation3]
              // While loop
              $region40: #{tpu_custom_call.1} parent=31 // loop_pre_header
                _
              $region41: #{tpu_custom_call.1} parent=31 // loop_header
                %s214 = sphi 0, %s216
                %p215 = scmp.ge.s32.totalorder %s214, %s207
                %s219 = sphi 0, %s226
                %s220 = sphi %s210, %s229
                %s221 = sphi %s212, %s230
              $region42: #{tpu_custom_call.1} parent=31 // loop_header_branch
                %218 = sbr.rel (%p215) target = $region46
              $region43: #{tpu_custom_call.1} parent=31 // loop_body
                %v222 = vld [vmem:[%s220] sm:$0xff]
                %223 = vst [vmem:[%s221] sm:$0xff] %v222
                %s224 = sadd.s32 1, %s219
                %p225 = scmp.ge.s32.totalorder %s224, %s207
                %s226 = scalar_select %p225, 0, %s224
                %s227 = smul.u32 %s226, 16
                %s228 = smul.u32 %s226, 8
                %s229 = scalar_lea.vmem %s210, %s227
                %s230 = scalar_lea.vmem %s212, %s228 [#allocation3]
              $region44: #{tpu_custom_call.1} parent=31 // loop_footer
                %s216 = sadd.s32 %s214, 1
              $region45: #{tpu_custom_call.1} parent=31 // loop_footer_branch
                %213 = sbr.rel target = $region41
              $region46: #{tpu_custom_call.1} parent=31 // loop_exit
                _
            $region32: #{tpu_custom_call.1} parent=23 // pred_fallthru
              _
          $region24: #{tpu_custom_call.1} parent=19 // pred_fallthru
            _
          %290 = vnop
        $region20: #{tpu_custom_call.1} parent=15 // pred_fallthru
          _
        // Predicated region
        $region69: #{tpu_custom_call.1} parent=15 // pred_check
          %p291 = pneg %p74
        $region70: #{tpu_custom_call.1} parent=15 // pred_check_branch
          %293 = sbr.rel (%p291) target = $region72
        $region71: #{tpu_custom_call.1} parent=15 // pred_region
          %s294 = sand.u32 %s64, 1
          %s295 = scalar_lea.sflag [#allocation5], %s294
          %s296 = sand.u32 %s64, 1
          %s297 = smul.addr %s296, 64
          %s298 = scalar_lea.vmem [#allocation4], %s297
          %s299 = smul.u32 8, %s19
          %s300 = ssub.s32 6, %s299
          %s301 = smul.u32 128, %s300
          %s303 = ssub.s32 1024, %s301
          %304 = vsyncadd %s295, %s303
          %p305 = scmp.ne.s32.totalorder 0, %s301
          %s306 = smul.addr %s299, 2
          %s307 = sadd.s32 %s20, %s306
          %s308 = smul.addr %s307, 128
          %s309 = scalar_lea.hbm %s1, %s308
          %s310 = smul.u32 8, %s300
          %s311 = sshll.u32 %s298, 4
          %s312 = int_to_ptr.vmem [resolvable:$true] %s311
          %s313 = sshll.u32 %s310, 4
          %317 = dma.hbm_to_vmem [thread:$0]  (%p305), %s309, %s313, %s312, %s295, 256, 128, 8
        $region72: #{tpu_custom_call.1} parent=15 // pred_fallthru
          _
        // Predicated region
        $region73: #{tpu_custom_call.1} parent=15 // pred_check
          %p318 = pneg %p102
        $region74: #{tpu_custom_call.1} parent=15 // pred_check_branch
          %320 = sbr.rel (%p318) target = $region76
        $region75: #{tpu_custom_call.1} parent=15 // pred_region
          %s321 = sand.u32 %s92, 1
          %s322 = sand.u32 %s92, 1
          %s323 = smul.addr %s322, 64
          %s324 = scalar_lea.vmem [#allocation6], %s323
          %s325 = smul.u32 8, %s19
          %s326 = ssub.s32 6, %s325
          %s327 = smul.u32 128, %s326
          %p328 = scmp.ne.s32.totalorder 0, %s327
          %s329 = smul.addr %s325, 2
          %s330 = sadd.s32 %s20, %s329
          %s331 = smul.addr %s330, 8
          %s332 = scalar_lea.vmem %s2, %s331
          // Predicated region
          $region77: #{tpu_custom_call.1} parent=75 // pred_check
            %p333 = pneg %p328
          $region78: #{tpu_custom_call.1} parent=75 // pred_check_branch
            %335 = sbr.rel (%p333) target = $region80
          $region79: #{tpu_custom_call.1} parent=75 // pred_region
            // Predicated region
            $region81: #{tpu_custom_call.1} parent=79 // pred_check
              _
            $region82: #{tpu_custom_call.1} parent=79 // pred_check_branch
              %337 = sbr.rel (0) target = $region84
            $region83: #{tpu_custom_call.1} parent=79 // pred_region
              // Predicated region
              $region103: #{tpu_custom_call.1} parent=83 // pred_check
                _
              $region104: #{tpu_custom_call.1} parent=83 // pred_check_branch
                %397 = sbr.rel (0) target = $region106
              $region105: #{tpu_custom_call.1} parent=83 // pred_region
                %s398 = sdiv.u32.pop %s326, 6
                %s399 = srem.u32.pop %s326, 6
                // While loop
                $region107: #{tpu_custom_call.1} parent=105 // loop_pre_header
                  _
                $region108: #{tpu_custom_call.1} parent=105 // loop_header
                  %s401 = sphi 0, %s403
                  %p402 = scmp.ge.s32.totalorder %s401, %s398
                  %s406 = sphi 0, %s423
                  %s407 = sphi %s332, %s426
                  %s408 = sphi %s324, %s427
                $region109: #{tpu_custom_call.1} parent=105 // loop_header_branch
                  %405 = sbr.rel (%p402) target = $region113
                $region110: #{tpu_custom_call.1} parent=105 // loop_body
                  %v409 = vld [vmem:[%s407] sm:$0xff]
                  %410 = vst [vmem:[%s408] sm:$0xff] %v409
                  %v411 = vld [vmem:[%s407 + $0x10] sm:$0xff]
                  %412 = vst [vmem:[%s408 + $0x8] sm:$0xff] %v411
                  %v413 = vld [vmem:[%s407 + $0x20] sm:$0xff]
                  %414 = vst [vmem:[%s408 + $0x10] sm:$0xff] %v413
                  %v415 = vld [vmem:[%s407 + $0x30] sm:$0xff]
                  %416 = vst [vmem:[%s408 + $0x18] sm:$0xff] %v415
                  %v417 = vld [vmem:[%s407 + $0x40] sm:$0xff]
                  %418 = vst [vmem:[%s408 + $0x20] sm:$0xff] %v417
                  %v419 = vld [vmem:[%s407 + $0x50] sm:$0xff]
                  %420 = vst [vmem:[%s408 + $0x28] sm:$0xff] %v419
                  %s421 = sadd.s32 1, %s406
                  %p422 = scmp.ge.s32.totalorder %s421, %s398
                  %s423 = scalar_select %p422, 0, %s421
                  %s424 = smul.u32 %s423, 96
                  %s425 = smul.u32 %s423, 48
                  %s426 = scalar_lea.vmem %s332, %s424
                  %s427 = scalar_lea.vmem %s324, %s425 [#allocation6]
                $region111: #{tpu_custom_call.1} parent=105 // loop_footer
                  %s403 = sadd.s32 %s401, 1
                $region112: #{tpu_custom_call.1} parent=105 // loop_footer_branch
                  %400 = sbr.rel target = $region108
                $region113: #{tpu_custom_call.1} parent=105 // loop_exit
                  _
                %s428 = sdiv.u32.pop %s326, 6
                %s429 = srem.u32.pop %s326, 6
                %s430 = smul.u32 %s428, 6
                %s431 = smul.u32 16, %s430
                %s432 = scalar_lea.vmem %s332, %s431
                %s433 = smul.u32 8, %s430
                %s434 = scalar_lea.vmem %s324, %s433 [#allocation6]
                // While loop
                $region114: #{tpu_custom_call.1} parent=105 // loop_pre_header
                  _
                $region115: #{tpu_custom_call.1} parent=105 // loop_header
                  %s436 = sphi 0, %s438
                  %p437 = scmp.ge.s32.totalorder %s436, %s429
                  %s441 = sphi 0, %s448
                  %s442 = sphi %s432, %s451
                  %s443 = sphi %s434, %s452
                $region116: #{tpu_custom_call.1} parent=105 // loop_header_branch
                  %440 = sbr.rel (%p437) target = $region120
                $region117: #{tpu_custom_call.1} parent=105 // loop_body
                  %v444 = vld [vmem:[%s442] sm:$0xff]
                  %445 = vst [vmem:[%s443] sm:$0xff] %v444
                  %s446 = sadd.s32 1, %s441
                  %p447 = scmp.ge.s32.totalorder %s446, %s429
                  %s448 = scalar_select %p447, 0, %s446
                  %s449 = smul.u32 %s448, 16
                  %s450 = smul.u32 %s448, 8
                  %s451 = scalar_lea.vmem %s432, %s449
                  %s452 = scalar_lea.vmem %s434, %s450 [#allocation6]
                $region118: #{tpu_custom_call.1} parent=105 // loop_footer
                  %s438 = sadd.s32 %s436, 1
                $region119: #{tpu_custom_call.1} parent=105 // loop_footer_branch
                  %435 = sbr.rel target = $region115
                $region120: #{tpu_custom_call.1} parent=105 // loop_exit
                  _
              $region106: #{tpu_custom_call.1} parent=83 // pred_fallthru
                _
              // Predicated region
              $region121: #{tpu_custom_call.1} parent=83 // pred_check
                _
              $region122: #{tpu_custom_call.1} parent=83 // pred_check_branch
                %454 = sbr.rel target = $region124
              $region123: #{tpu_custom_call.1} parent=83 // pred_region
                _
              $region124: #{tpu_custom_call.1} parent=83 // pred_fallthru
                _
            $region84: #{tpu_custom_call.1} parent=79 // pred_fallthru
              _
            // Predicated region
            $region85: #{tpu_custom_call.1} parent=79 // pred_check
              _
            $region86: #{tpu_custom_call.1} parent=79 // pred_check_branch
              %339 = sbr.rel target = $region88
            $region87: #{tpu_custom_call.1} parent=79 // pred_region
              %s341 = sdiv.u32.pop %s326, 6
              %s342 = srem.u32.pop %s326, 6
              // While loop
              $region89: #{tpu_custom_call.1} parent=87 // loop_pre_header
                _
              $region90: #{tpu_custom_call.1} parent=87 // loop_header
                %s344 = sphi 0, %s346
                %p345 = scmp.ge.s32.totalorder %s344, %s341
                %s349 = sphi 0, %s366
                %s350 = sphi %s332, %s369
                %s351 = sphi %s324, %s370
              $region91: #{tpu_custom_call.1} parent=87 // loop_header_branch
                %348 = sbr.rel (%p345) target = $region95
              $region92: #{tpu_custom_call.1} parent=87 // loop_body
                %v352 = vld [vmem:[%s350] sm:$0xff]
                %353 = vst [vmem:[%s351] sm:$0xff] %v352
                %v354 = vld [vmem:[%s350 + $0x10] sm:$0xff]
                %355 = vst [vmem:[%s351 + $0x8] sm:$0xff] %v354
                %v356 = vld [vmem:[%s350 + $0x20] sm:$0xff]
                %357 = vst [vmem:[%s351 + $0x10] sm:$0xff] %v356
                %v358 = vld [vmem:[%s350 + $0x30] sm:$0xff]
                %359 = vst [vmem:[%s351 + $0x18] sm:$0xff] %v358
                %v360 = vld [vmem:[%s350 + $0x40] sm:$0xff]
                %361 = vst [vmem:[%s351 + $0x20] sm:$0xff] %v360
                %v362 = vld [vmem:[%s350 + $0x50] sm:$0xff]
                %363 = vst [vmem:[%s351 + $0x28] sm:$0xff] %v362
                %s364 = sadd.s32 1, %s349
                %p365 = scmp.ge.s32.totalorder %s364, %s341
                %s366 = scalar_select %p365, 0, %s364
                %s367 = smul.u32 %s366, 96
                %s368 = smul.u32 %s366, 48
                %s369 = scalar_lea.vmem %s332, %s367
                %s370 = scalar_lea.vmem %s324, %s368 [#allocation6]
              $region93: #{tpu_custom_call.1} parent=87 // loop_footer
                %s346 = sadd.s32 %s344, 1
              $region94: #{tpu_custom_call.1} parent=87 // loop_footer_branch
                %343 = sbr.rel target = $region90
              $region95: #{tpu_custom_call.1} parent=87 // loop_exit
                _
              %s371 = sdiv.u32.pop %s326, 6
              %s372 = srem.u32.pop %s326, 6
              %s373 = smul.u32 %s371, 6
              %s374 = smul.u32 16, %s373
              %s375 = scalar_lea.vmem %s332, %s374
              %s376 = smul.u32 8, %s373
              %s377 = scalar_lea.vmem %s324, %s376 [#allocation6]
              // While loop
              $region96: #{tpu_custom_call.1} parent=87 // loop_pre_header
                _
              $region97: #{tpu_custom_call.1} parent=87 // loop_header
                %s379 = sphi 0, %s381
                %p380 = scmp.ge.s32.totalorder %s379, %s372
                %s384 = sphi 0, %s391
                %s385 = sphi %s375, %s394
                %s386 = sphi %s377, %s395
              $region98: #{tpu_custom_call.1} parent=87 // loop_header_branch
                %383 = sbr.rel (%p380) target = $region102
              $region99: #{tpu_custom_call.1} parent=87 // loop_body
                %v387 = vld [vmem:[%s385] sm:$0xff]
                %388 = vst [vmem:[%s386] sm:$0xff] %v387
                %s389 = sadd.s32 1, %s384
                %p390 = scmp.ge.s32.totalorder %s389, %s372
                %s391 = scalar_select %p390, 0, %s389
                %s392 = smul.u32 %s391, 16
                %s393 = smul.u32 %s391, 8
                %s394 = scalar_lea.vmem %s375, %s392
                %s395 = scalar_lea.vmem %s377, %s393 [#allocation6]
              $region100: #{tpu_custom_call.1} parent=87 // loop_footer
                %s381 = sadd.s32 %s379, 1
              $region101: #{tpu_custom_call.1} parent=87 // loop_footer_branch
                %378 = sbr.rel target = $region97
              $region102: #{tpu_custom_call.1} parent=87 // loop_exit
                _
            $region88: #{tpu_custom_call.1} parent=79 // pred_fallthru
              _
          $region80: #{tpu_custom_call.1} parent=75 // pred_fallthru
            _
          %455 = vnop
        $region76: #{tpu_custom_call.1} parent=15 // pred_fallthru
          _
      $region16: #{tpu_custom_call.1} parent=5 // pred_fallthru
        _
      %p456 = scmp.le.s32.totalorder 1, %s12
      %p457 = scmp.lt.s32.totalorder %s12, 3
      %p458 = pnand %p456, %p457
      %p459 = pneg %p458
      // Predicated region
      $region125: #{tpu_custom_call.1} parent=5 // pred_check
        _
      $region126: #{tpu_custom_call.1} parent=5 // pred_check_branch
        %461 = sbr.rel (%p458) target = $region128
      $region127: #{tpu_custom_call.1} parent=5 // pred_region
        %s462 = ssub.s32 %s12, 1
        %s463 = sand.u32 %s39, 1
        %s464 = sand.u32 %s39, 1
        %s465 = smul.addr %s464, 64
        %s466 = scalar_lea.vmem [#allocation3], %s465
        // Predicated region
        $region129: #{tpu_custom_call.1} parent=127 // pred_check
          %p467 = pneg %p52
        $region130: #{tpu_custom_call.1} parent=127 // pred_check_branch
          %469 = sbr.rel (%p467) target = $region132
        $region131: #{tpu_custom_call.1} parent=127 // pred_region
          _
        $region132: #{tpu_custom_call.1} parent=127 // pred_fallthru
          _
        %s470 = sand.u32 %s67, 1
        %s471 = scalar_lea.sflag [#allocation5], %s470
        %s472 = sand.u32 %s67, 1
        %s473 = smul.addr %s472, 64
        %s474 = scalar_lea.vmem [#allocation4], %s473
        // Predicated region
        $region133: #{tpu_custom_call.1} parent=127 // pred_check
          %p475 = pneg %p80
        $region134: #{tpu_custom_call.1} parent=127 // pred_check_branch
          %477 = sbr.rel (%p475) target = $region136
        $region135: #{tpu_custom_call.1} parent=127 // pred_region
          %478 = dma.done %s471, 1024
        $region136: #{tpu_custom_call.1} parent=127 // pred_fallthru
          _
        %s479 = sand.u32 %s95, 1
        %s480 = sand.u32 %s95, 1
        %s481 = smul.addr %s480, 64
        %s482 = scalar_lea.vmem [#allocation6], %s481
        // Predicated region
        $region137: #{tpu_custom_call.1} parent=127 // pred_check
          %p483 = pneg %p108
        $region138: #{tpu_custom_call.1} parent=127 // pred_check_branch
          %485 = sbr.rel (%p483) target = $region140
        $region139: #{tpu_custom_call.1} parent=127 // pred_region
          _
        $region140: #{tpu_custom_call.1} parent=127 // pred_fallthru
          _
        %s486 = sand.u32 %s39, 1
        %s487 = sand.u32 %s39, 1
        %s488 = smul.addr %s487, 64
        %s489 = scalar_lea.vmem [#allocation3], %s488
        %p490 = pneg %p52
        %p491 = pneg %p49
        %s492 = sand.u32 %s67, 1
        %s493 = scalar_lea.sflag [#allocation5], %s492
        %s494 = sand.u32 %s67, 1
        %s495 = smul.addr %s494, 64
        %s496 = scalar_lea.vmem [#allocation4], %s495
        %p497 = pneg %p80
        %p498 = pneg %p77
        %s499 = sand.u32 %s95, 1
        %s500 = sand.u32 %s95, 1
        %s501 = smul.addr %s500, 64
        %s502 = scalar_lea.vmem [#allocation6], %s501
        %p503 = pneg %p108
        %p504 = pneg %p105
        %p505 = pneg %p134
        %p506 = pneg %p131
        %s507 = smul.u32 8, %s21
        %s508 = ssub.s32 6, %s507
        %s509 = smul.u32 128, %s508
        %s510 = smul.u32 8, %s21
        %s511 = ssub.s32 6, %s510
        %s512 = smul.u32 128, %s511
        %s513 = smul.u32 8, %s21
        %s514 = ssub.s32 6, %s513
        %s515 = smul.u32 128, %s514
        %s516 = smul.u32 8, %s21
        %s517 = ssub.s32 6, %s516
        %s518 = smul.u32 128, %s517
        %p519 = scmp.eq.s32.totalorder %s22, 0
        // Predicated region
        $region141: #{tpu_custom_call.1} parent=127 // pred_check
          %p520 = pneg %p519
        $region142: #{tpu_custom_call.1} parent=127 // pred_check_branch
          %522 = sbr.rel (%p520) target = $region144
        $region143: #{tpu_custom_call.1} parent=127 // pred_region
          %523 = vst [vmem:[#allocation2] sm:$0xff] 0.0
          %524 = vst [vmem:[#allocation2 + $0x8] sm:$0xff] 0.0
          %525 = vst [vmem:[#allocation2 + $0x10] sm:$0xff] 0.0
          %526 = vst [vmem:[#allocation2 + $0x18] sm:$0xff] 0.0
          %527 = vst [vmem:[#allocation2 + $0x20] sm:$0xff] 0.0
          %528 = vst [vmem:[#allocation2 + $0x28] sm:$0xff] 0.0
          %529 = vst [vmem:[#allocation2 + $0x30] sm:$0xff] 0.0
          %530 = vst [vmem:[#allocation2 + $0x38] sm:$0xff] 0.0
        $region144: #{tpu_custom_call.1} parent=127 // pred_fallthru
          _
        %v531 = vld [vmem:[%s466] sm:$0xff]
        %v532 = vld [vmem:[%s466 + $0x8] sm:$0xff]
        %v533 = vld [vmem:[%s466 + $0x10] sm:$0xff]
        %v534 = vld [vmem:[%s466 + $0x18] sm:$0xff]
        %v535 = vld [vmem:[%s466 + $0x20] sm:$0xff]
        %v536 = vld [vmem:[%s466 + $0x28] sm:$0xff]
        %v537 = vld [vmem:[%s466 + $0x30] sm:$0xff]
        %v538 = vld [vmem:[%s466 + $0x38] sm:$0xff]
        %v539 = vld [vmem:[%s474] sm:$0xff]
        %v540 = vld [vmem:[%s474 + $0x8] sm:$0xff]
        %v541 = vld [vmem:[%s474 + $0x10] sm:$0xff]
        %v542 = vld [vmem:[%s474 + $0x18] sm:$0xff]
        %v543 = vld [vmem:[%s474 + $0x20] sm:$0xff]
        %v544 = vld [vmem:[%s474 + $0x28] sm:$0xff]
        %v545 = vld [vmem:[%s474 + $0x30] sm:$0xff]
        %v546 = vld [vmem:[%s474 + $0x38] sm:$0xff]
        %v547 = vadd.f32 %v539, 1.0
        %v548 = vadd.f32 %v540, 1.0
        %v549 = vadd.f32 %v541, 1.0
        %v550 = vadd.f32 %v542, 1.0
        %v551 = vadd.f32 %v543, 1.0
        %v552 = vadd.f32 %v544, 1.0
        %v553 = vadd.f32 %v545, 1.0
        %v554 = vadd.f32 %v546, 1.0
        %v555 = vlog2.pop %v547
        %v556 = vmul.f32 %v555, 0.6931472
        %v557 = vlog2.pop %v548
        %v558 = vmul.f32 %v557, 0.6931472
        %v559 = vlog2.pop %v549
        %v560 = vmul.f32 %v559, 0.6931472
        %v561 = vlog2.pop %v550
        %v562 = vmul.f32 %v561, 0.6931472
        %v563 = vlog2.pop %v551
        %v564 = vmul.f32 %v563, 0.6931472
        %v565 = vlog2.pop %v552
        %v566 = vmul.f32 %v565, 0.6931472
        %v567 = vlog2.pop %v553
        %v568 = vmul.f32 %v567, 0.6931472
        %v569 = vlog2.pop %v554
        %v570 = vmul.f32 %v569, 0.6931472
        %v571 = vsub.f32 %v531, %v556
        %v572 = vsub.f32 %v532, %v558
        %v573 = vsub.f32 %v533, %v560
        %v574 = vsub.f32 %v534, %v562
        %v575 = vsub.f32 %v535, %v564
        %v576 = vsub.f32 %v536, %v566
        %v577 = vsub.f32 %v537, %v568
        %v578 = vsub.f32 %v538, %v570
        %v579 = vmul.f32 %v571, %v571
        %v580 = vmul.f32 %v572, %v572
        %v581 = vmul.f32 %v573, %v573
        %v582 = vmul.f32 %v574, %v574
        %v583 = vmul.f32 %v575, %v575
        %v584 = vmul.f32 %v576, %v576
        %v585 = vmul.f32 %v577, %v577
        %v586 = vmul.f32 %v578, %v578
        %v587 = vld [vmem:[%s482] sm:$0xff]
        %v588 = vld [vmem:[%s482 + $0x8] sm:$0xff]
        %v589 = vld [vmem:[%s482 + $0x10] sm:$0xff]
        %v590 = vld [vmem:[%s482 + $0x18] sm:$0xff]
        %v591 = vld [vmem:[%s482 + $0x20] sm:$0xff]
        %v592 = vld [vmem:[%s482 + $0x28] sm:$0xff]
        %v593 = vld [vmem:[%s482 + $0x30] sm:$0xff]
        %v594 = vld [vmem:[%s482 + $0x38] sm:$0xff]
        %vm595 = vcmp.ne.s32.totalorder %v587, 0
        %vm596 = vcmp.ne.s32.totalorder %v588, 0
        %vm597 = vcmp.ne.s32.totalorder %v589, 0
        %vm598 = vcmp.ne.s32.totalorder %v590, 0
        %vm599 = vcmp.ne.s32.totalorder %v591, 0
        %vm600 = vcmp.ne.s32.totalorder %v592, 0
        %vm601 = vcmp.ne.s32.totalorder %v593, 0
        %vm602 = vcmp.ne.s32.totalorder %v594, 0
        %v603 = vsel %vm595, %v579, 0.0
        %v604 = vsel %vm596, %v580, 0.0
        %v605 = vsel %vm597, %v581, 0.0
        %v606 = vsel %vm598, %v582, 0.0
        %v607 = vsel %vm599, %v583, 0.0
        %v608 = vsel %vm600, %v584, 0.0
        %v609 = vsel %vm601, %v585, 0.0
        %v610 = vsel %vm602, %v586, 0.0
        %v611 = vld [vmem:[#allocation2] sm:$0xff]
        %v612 = vld [vmem:[#allocation2 + $0x8] sm:$0xff]
        %v613 = vld [vmem:[#allocation2 + $0x10] sm:$0xff]
        %v614 = vld [vmem:[#allocation2 + $0x18] sm:$0xff]
        %v615 = vld [vmem:[#allocation2 + $0x20] sm:$0xff]
        %v616 = vld [vmem:[#allocation2 + $0x28] sm:$0xff]
        %v617 = vld [vmem:[#allocation2 + $0x30] sm:$0xff]
        %v618 = vld [vmem:[#allocation2 + $0x38] sm:$0xff]
        %v619 = vadd.f32 %v611, %v603
        %v620 = vadd.f32 %v612, %v604
        %v621 = vadd.f32 %v613, %v605
        %v622 = vadd.f32 %v614, %v606
        %v623 = vadd.f32 %v615, %v607
        %v624 = vadd.f32 %v616, %v608
        %v625 = vadd.f32 %v617, %v609
        %v626 = vadd.f32 %v618, %v610
        %627 = vst [vmem:[#allocation2] sm:$0xff] %v619
        %628 = vst [vmem:[#allocation2 + $0x8] sm:$0xff] %v620
        %629 = vst [vmem:[#allocation2 + $0x10] sm:$0xff] %v621
        %630 = vst [vmem:[#allocation2 + $0x18] sm:$0xff] %v622
        %631 = vst [vmem:[#allocation2 + $0x20] sm:$0xff] %v623
        %632 = vst [vmem:[#allocation2 + $0x28] sm:$0xff] %v624
        %633 = vst [vmem:[#allocation2 + $0x30] sm:$0xff] %v625
        %634 = vst [vmem:[#allocation2 + $0x38] sm:$0xff] %v626
        %p635 = scmp.eq.s32.totalorder %s22, 1
        // Predicated region
        $region145: #{tpu_custom_call.1} parent=127 // pred_check
          %p636 = pneg %p635
        $region146: #{tpu_custom_call.1} parent=127 // pred_check_branch
          %638 = sbr.rel (%p636) target = $region148
        $region147: #{tpu_custom_call.1} parent=127 // pred_region
          %v639 = vld [vmem:[#allocation2] sm:$0xff]
          %v640 = vld [vmem:[#allocation2 + $0x8] sm:$0xff]
          %v641 = vld [vmem:[#allocation2 + $0x10] sm:$0xff]
          %v642 = vld [vmem:[#allocation2 + $0x18] sm:$0xff]
          %v643 = vld [vmem:[#allocation2 + $0x20] sm:$0xff]
          %v644 = vld [vmem:[#allocation2 + $0x28] sm:$0xff]
          %v645 = vld [vmem:[#allocation2 + $0x30] sm:$0xff]
          %v646 = vld [vmem:[#allocation2 + $0x38] sm:$0xff]
          %647 = vadd.xlane.f32.xlu0 %v639
          %v648 = vpop.xlane.xlu0 %647
          %649 = vadd.xlane.f32.xlu0 %v640
          %v650 = vpop.xlane.xlu0 %649
          %651 = vadd.xlane.f32.xlu0 %v641
          %v652 = vpop.xlane.xlu0 %651
          %653 = vadd.xlane.f32.xlu0 %v642
          %v654 = vpop.xlane.xlu0 %653
          %655 = vadd.xlane.f32.xlu0 %v643
          %v656 = vpop.xlane.xlu0 %655
          %657 = vadd.xlane.f32.xlu0 %v644
          %v658 = vpop.xlane.xlu0 %657
          %659 = vadd.xlane.f32.xlu0 %v645
          %v660 = vpop.xlane.xlu0 %659
          %661 = vadd.xlane.f32.xlu0 %v646
          %v662 = vpop.xlane.xlu0 %661
          %v663 = vmul.f32 %v648, 0.00390625
          %v664 = vmul.f32 %v650, 0.00390625
          %v665 = vmul.f32 %v652, 0.00390625
          %v666 = vmul.f32 %v654, 0.00390625
          %v667 = vmul.f32 %v656, 0.00390625
          %v668 = vmul.f32 %v658, 0.00390625
          %v669 = vmul.f32 %v660, 0.00390625
          %v670 = vmul.f32 %v662, 0.00390625
          %vm671 = vcmask 7168
          %672 = vst.msk [vmem:[#allocation7] sm:$0xff] %vm671, %v663
          %673 = vst.msk [vmem:[#allocation7 + $0x8] sm:$0xff] %vm671, %v664
          %674 = vst.msk [vmem:[#allocation7 + $0x10] sm:$0xff] %vm671, %v665
          %675 = vst.msk [vmem:[#allocation7 + $0x18] sm:$0xff] %vm671, %v666
          %676 = vst.msk [vmem:[#allocation7 + $0x20] sm:$0xff] %vm671, %v667
          %677 = vst.msk [vmem:[#allocation7 + $0x28] sm:$0xff] %vm671, %v668
          %678 = vst.msk [vmem:[#allocation7 + $0x30] sm:$0xff] %vm671, %v669
          %679 = vst.msk [vmem:[#allocation7 + $0x38] sm:$0xff] %vm671, %v670
        $region148: #{tpu_custom_call.1} parent=127 // pred_fallthru
          _
        // Predicated region
        $region149: #{tpu_custom_call.1} parent=127 // pred_check
          %p680 = pneg %p131
        $region150: #{tpu_custom_call.1} parent=127 // pred_check_branch
          %682 = sbr.rel (%p680) target = $region152
        $region151: #{tpu_custom_call.1} parent=127 // pred_region
          %s683 = smul.u32 8, %s21
          %s684 = ssub.s32 6, %s683
          %s685 = smul.u32 128, %s684
          %p686 = scmp.ne.s32.totalorder 0, %s685
          %s687 = smul.addr %s683, 8
          %s688 = scalar_lea.vmem %s3, %s687
          // Predicated region
          $region153: #{tpu_custom_call.1} parent=151 // pred_check
            %p689 = pneg %p686
          $region154: #{tpu_custom_call.1} parent=151 // pred_check_branch
            %691 = sbr.rel (%p689) target = $region156
          $region155: #{tpu_custom_call.1} parent=151 // pred_region
            // Predicated region
            $region157: #{tpu_custom_call.1} parent=155 // pred_check
              _
            $region158: #{tpu_custom_call.1} parent=155 // pred_check_branch
              %693 = sbr.rel (0) target = $region160
            $region159: #{tpu_custom_call.1} parent=155 // pred_region
              // Predicated region
              $region179: #{tpu_custom_call.1} parent=159 // pred_check
                _
              $region180: #{tpu_custom_call.1} parent=159 // pred_check_branch
                %753 = sbr.rel (0) target = $region182
              $region181: #{tpu_custom_call.1} parent=159 // pred_region
                %s754 = sdiv.u32.pop %s684, 6
                %s755 = srem.u32.pop %s684, 6
                // While loop
                $region183: #{tpu_custom_call.1} parent=181 // loop_pre_header
                  _
                $region184: #{tpu_custom_call.1} parent=181 // loop_header
                  %s757 = sphi 0, %s759
                  %p758 = scmp.ge.s32.totalorder %s757, %s754
                  %s762 = sphi 0, %s779
                  %s763 = sphi [#allocation7], %s782
                  %s764 = sphi %s688, %s783
                $region185: #{tpu_custom_call.1} parent=181 // loop_header_branch
                  %761 = sbr.rel (%p758) target = $region189
                $region186: #{tpu_custom_call.1} parent=181 // loop_body
                  %v765 = vld [vmem:[%s763] sm:$0xff]
                  %766 = vst [vmem:[%s764] sm:$0xff] %v765
                  %v767 = vld [vmem:[%s763 + $0x8] sm:$0xff]
                  %768 = vst [vmem:[%s764 + $0x8] sm:$0xff] %v767
                  %v769 = vld [vmem:[%s763 + $0x10] sm:$0xff]
                  %770 = vst [vmem:[%s764 + $0x10] sm:$0xff] %v769
                  %v771 = vld [vmem:[%s763 + $0x18] sm:$0xff]
                  %772 = vst [vmem:[%s764 + $0x18] sm:$0xff] %v771
                  %v773 = vld [vmem:[%s763 + $0x20] sm:$0xff]
                  %774 = vst [vmem:[%s764 + $0x20] sm:$0xff] %v773
                  %v775 = vld [vmem:[%s763 + $0x28] sm:$0xff]
                  %776 = vst [vmem:[%s764 + $0x28] sm:$0xff] %v775
                  %s777 = sadd.s32 1, %s762
                  %p778 = scmp.ge.s32.totalorder %s777, %s754
                  %s779 = scalar_select %p778, 0, %s777
                  %s780 = smul.u32 %s779, 48
                  %s781 = smul.u32 %s779, 48
                  %s782 = scalar_lea.vmem [#allocation7], %s780
                  %s783 = scalar_lea.vmem %s688, %s781
                $region187: #{tpu_custom_call.1} parent=181 // loop_footer
                  %s759 = sadd.s32 %s757, 1
                $region188: #{tpu_custom_call.1} parent=181 // loop_footer_branch
                  %756 = sbr.rel target = $region184
                $region189: #{tpu_custom_call.1} parent=181 // loop_exit
                  _
                %s784 = sdiv.u32.pop %s684, 6
                %s785 = srem.u32.pop %s684, 6
                %s786 = smul.u32 %s784, 6
                %s787 = smul.u32 8, %s786
                %s788 = scalar_lea.vmem [#allocation7], %s787
                %s789 = smul.u32 8, %s786
                %s790 = scalar_lea.vmem %s688, %s789
                // While loop
                $region190: #{tpu_custom_call.1} parent=181 // loop_pre_header
                  _
                $region191: #{tpu_custom_call.1} parent=181 // loop_header
                  %s792 = sphi 0, %s794
                  %p793 = scmp.ge.s32.totalorder %s792, %s785
                  %s797 = sphi 0, %s804
                  %s798 = sphi %s788, %s807
                  %s799 = sphi %s790, %s808
                $region192: #{tpu_custom_call.1} parent=181 // loop_header_branch
                  %796 = sbr.rel (%p793) target = $region196
                $region193: #{tpu_custom_call.1} parent=181 // loop_body
                  %v800 = vld [vmem:[%s798] sm:$0xff]
                  %801 = vst [vmem:[%s799] sm:$0xff] %v800
                  %s802 = sadd.s32 1, %s797
                  %p803 = scmp.ge.s32.totalorder %s802, %s785
                  %s804 = scalar_select %p803, 0, %s802
                  %s805 = smul.u32 %s804, 8
                  %s806 = smul.u32 %s804, 8
                  %s807 = scalar_lea.vmem %s788, %s805 [#allocation7]
                  %s808 = scalar_lea.vmem %s790, %s806
                $region194: #{tpu_custom_call.1} parent=181 // loop_footer
                  %s794 = sadd.s32 %s792, 1
                $region195: #{tpu_custom_call.1} parent=181 // loop_footer_branch
                  %791 = sbr.rel target = $region191
                $region196: #{tpu_custom_call.1} parent=181 // loop_exit
                  _
              $region182: #{tpu_custom_call.1} parent=159 // pred_fallthru
                _
              // Predicated region
              $region197: #{tpu_custom_call.1} parent=159 // pred_check
                _
              $region198: #{tpu_custom_call.1} parent=159 // pred_check_branch
                %810 = sbr.rel target = $region200
              $region199: #{tpu_custom_call.1} parent=159 // pred_region
                _
              $region200: #{tpu_custom_call.1} parent=159 // pred_fallthru
                _
            $region160: #{tpu_custom_call.1} parent=155 // pred_fallthru
              _
            // Predicated region
            $region161: #{tpu_custom_call.1} parent=155 // pred_check
              _
            $region162: #{tpu_custom_call.1} parent=155 // pred_check_branch
              %695 = sbr.rel target = $region164
            $region163: #{tpu_custom_call.1} parent=155 // pred_region
              %s697 = sdiv.u32.pop %s684, 6
              %s698 = srem.u32.pop %s684, 6
              // While loop
              $region165: #{tpu_custom_call.1} parent=163 // loop_pre_header
                _
              $region166: #{tpu_custom_call.1} parent=163 // loop_header
                %s700 = sphi 0, %s702
                %p701 = scmp.ge.s32.totalorder %s700, %s697
                %s705 = sphi 0, %s722
                %s706 = sphi [#allocation7], %s725
                %s707 = sphi %s688, %s726
              $region167: #{tpu_custom_call.1} parent=163 // loop_header_branch
                %704 = sbr.rel (%p701) target = $region171
              $region168: #{tpu_custom_call.1} parent=163 // loop_body
                %v708 = vld [vmem:[%s706] sm:$0xff]
                %709 = vst [vmem:[%s707] sm:$0xff] %v708
                %v710 = vld [vmem:[%s706 + $0x8] sm:$0xff]
                %711 = vst [vmem:[%s707 + $0x8] sm:$0xff] %v710
                %v712 = vld [vmem:[%s706 + $0x10] sm:$0xff]
                %713 = vst [vmem:[%s707 + $0x10] sm:$0xff] %v712
                %v714 = vld [vmem:[%s706 + $0x18] sm:$0xff]
                %715 = vst [vmem:[%s707 + $0x18] sm:$0xff] %v714
                %v716 = vld [vmem:[%s706 + $0x20] sm:$0xff]
                %717 = vst [vmem:[%s707 + $0x20] sm:$0xff] %v716
                %v718 = vld [vmem:[%s706 + $0x28] sm:$0xff]
                %719 = vst [vmem:[%s707 + $0x28] sm:$0xff] %v718
                %s720 = sadd.s32 1, %s705
                %p721 = scmp.ge.s32.totalorder %s720, %s697
                %s722 = scalar_select %p721, 0, %s720
                %s723 = smul.u32 %s722, 48
                %s724 = smul.u32 %s722, 48
                %s725 = scalar_lea.vmem [#allocation7], %s723
                %s726 = scalar_lea.vmem %s688, %s724
              $region169: #{tpu_custom_call.1} parent=163 // loop_footer
                %s702 = sadd.s32 %s700, 1
              $region170: #{tpu_custom_call.1} parent=163 // loop_footer_branch
                %699 = sbr.rel target = $region166
              $region171: #{tpu_custom_call.1} parent=163 // loop_exit
                _
              %s727 = sdiv.u32.pop %s684, 6
              %s728 = srem.u32.pop %s684, 6
              %s729 = smul.u32 %s727, 6
              %s730 = smul.u32 8, %s729
              %s731 = scalar_lea.vmem [#allocation7], %s730
              %s732 = smul.u32 8, %s729
              %s733 = scalar_lea.vmem %s688, %s732
              // While loop
              $region172: #{tpu_custom_call.1} parent=163 // loop_pre_header
                _
              $region173: #{tpu_custom_call.1} parent=163 // loop_header
                %s735 = sphi 0, %s737
                %p736 = scmp.ge.s32.totalorder %s735, %s728
                %s740 = sphi 0, %s747
                %s741 = sphi %s731, %s750
                %s742 = sphi %s733, %s751
              $region174: #{tpu_custom_call.1} parent=163 // loop_header_branch
                %739 = sbr.rel (%p736) target = $region178
              $region175: #{tpu_custom_call.1} parent=163 // loop_body
                %v743 = vld [vmem:[%s741] sm:$0xff]
                %744 = vst [vmem:[%s742] sm:$0xff] %v743
                %s745 = sadd.s32 1, %s740
                %p746 = scmp.ge.s32.totalorder %s745, %s728
                %s747 = scalar_select %p746, 0, %s745
                %s748 = smul.u32 %s747, 8
                %s749 = smul.u32 %s747, 8
                %s750 = scalar_lea.vmem %s731, %s748 [#allocation7]
                %s751 = scalar_lea.vmem %s733, %s749
              $region176: #{tpu_custom_call.1} parent=163 // loop_footer
                %s737 = sadd.s32 %s735, 1
              $region177: #{tpu_custom_call.1} parent=163 // loop_footer_branch
                %734 = sbr.rel target = $region173
              $region178: #{tpu_custom_call.1} parent=163 // loop_exit
                _
            $region164: #{tpu_custom_call.1} parent=155 // pred_fallthru
              _
          $region156: #{tpu_custom_call.1} parent=151 // pred_fallthru
            _
          %811 = vnop
        $region152: #{tpu_custom_call.1} parent=127 // pred_fallthru
          _
        // Predicated region
        $region201: #{tpu_custom_call.1} parent=127 // pred_check
          %p812 = pneg %p131
        $region202: #{tpu_custom_call.1} parent=127 // pred_check_branch
          %814 = sbr.rel (%p812) target = $region204
        $region203: #{tpu_custom_call.1} parent=127 // pred_region
          _
        $region204: #{tpu_custom_call.1} parent=127 // pred_fallthru
          _
      $region128: #{tpu_custom_call.1} parent=5 // pred_fallthru
        _
      %p815 = scmp.le.s32.totalorder 2, %s12
      // Predicated region
      $region205: #{tpu_custom_call.1} parent=5 // pred_check
        %p816 = pneg %p815
      $region206: #{tpu_custom_call.1} parent=5 // pred_check_branch
        %818 = sbr.rel (%p816) target = $region208
      $region207: #{tpu_custom_call.1} parent=5 // pred_region
        %s819 = ssub.s32 %s12, 2
      $region208: #{tpu_custom_call.1} parent=5 // pred_fallthru
        _
    $region6: #{tpu_custom_call.1} parent=1 // loop_footer
      %s16 = sadd.s32 1, %s12
    $region7: #{tpu_custom_call.1} parent=1 // loop_footer_branch
      %11 = sbr.rel target = $region3
    $region8: #{tpu_custom_call.1} parent=1 // loop_exit
      _
    %820 = vsyncpa [#allocation5], 1
    %s821 = scalar_lea.sflag [#allocation5], 1
    %822 = vsyncpa %s821, 1

</llo_original>
